<compile_context>
chip_gen: v7x
topology: tpu7x:2x2x1
jax: 0.10.0
libtpu: 0.0.40
codegen_flags: <defaults>
</compile_context>

<pallas_src>
import numpy as np
import jax
import jax.numpy as jnp
from jax.experimental import pallas as pl
from jax.experimental.pallas import tpu as pltpu


def _round_up(n: int, m: int) -> int:
    return ((n + m - 1) // m) * m


def _make_gfp_kernel(split_col: int):
    def kernel(x_ref, w_ref, o_ref):
        # x_ref: (TB, 1), w_ref: (1, K), o_ref: (TB, 2*K)
        x = x_ref[...]                      # (TB, 1)
        w = w_ref[...]                      # (1, K), resident across grid steps
        # Keep the exact op order of the reference: ((x * W) * 2) * pi.
        proj = x * w * 2.0 * np.pi          # rank-1 outer product on the VPU
        # Two 128-aligned lane-dense slabs -> unmasked vector stores.
        o_ref[:, :split_col] = jnp.sin(proj)
        o_ref[:, split_col:] = jnp.cos(proj)

    return kernel


def gaussian_fourier_projection(x, W, *, tile_b: int = 1024,
                                vmem_budget_bytes: int = 16 * 1024 * 1024):
    """x: (B,) float32 time steps; W: (H,) fixed random weights.

    Returns (B, 2*H) float32: concat([sin(2*pi*x*W), cos(2*pi*x*W)], -1),
    matching the PyTorch GaussianFourierProjection.forward output.
    """
    B = int(x.shape[0])
    H = int(W.shape[0])

    aligned = (H % 128 == 0) and H > 0
    K = H if aligned else _round_up(max(H, 1), 128)
    out_cols = 2 * K

    w2 = W.astype(jnp.float32).reshape(1, H)
    if K != H:
        w2 = jnp.pad(w2, ((0, 0), (0, K - H)))

    # Batch tile sized from the VMEM budget: double-buffered output block plus
    # the double-buffered (lane-padded to 128) x block must fit the scoped VMEM
    # limit on every generation (16 MiB budget << 32 MiB limit passed below).
    bytes_per_row = 2 * (out_cols * 4) + 2 * (128 * 4)
    TB = max(8, min(tile_b, vmem_budget_bytes // bytes_per_row))
    TB = (TB // 8) * 8
    B8 = _round_up(B, 8)
    TB = min(TB, B8)
    # v7x megacore: guarantee >=2 grid steps when the batch allows it so
    # dimension_semantics=("parallel",) can shard batch tiles across both TCs.
    if B8 > 8 and B8 // TB < 2:
        TB = _round_up(-(-B8 // 2), 8)
    Bp = _round_up(B, TB)

    x2 = x.astype(jnp.float32).reshape(B, 1)
    if Bp != B:
        x2 = jnp.pad(x2, ((0, Bp - B), (0, 0)))
    # TODO(synk): relayout x lane-dense ((Bp//128, 128) blocks + in-kernel
    # transpose) to avoid the (TB,1)->(TB,128)-padded input read when K is small.

    grid = (Bp // TB,)
    out = pl.pallas_call(
        _make_gfp_kernel(K),
        out_shape=jax.ShapeDtypeStruct((Bp, out_cols), jnp.float32),
        grid=grid,
        in_specs=[
            pl.BlockSpec((TB, 1), lambda i: (i, 0)),
            pl.BlockSpec((1, K), lambda i: (0, 0)),   # weight row stays resident
        ],
        out_specs=pl.BlockSpec((TB, out_cols), lambda i: (i, 0)),
        compiler_params=pltpu.CompilerParams(
            dimension_semantics=("parallel",),        # shards batch tiles on v7x
            vmem_limit_bytes=32 * 1024 * 1024,
        ),
        cost_estimate=pl.CostEstimate(
            flops=3 * Bp * K,
            transcendentals=2 * Bp * K,
            bytes_accessed=Bp * 4 + K * 4 + Bp * out_cols * 4,
        ),
    )(x2, w2)

    if aligned:
        # Common case (embed_dim % 256 == 0): kernel already wrote the final
        # [sin(:H) | cos(:H)] layout -- no padded writeback, no concatenate.
        return out if Bp == B else out[:B]
    # Unaligned half-dim fallback: strip lane padding, restore [sin(:H)|cos(:H)].
    return jnp.concatenate([out[:B, :H], out[:B, K:K + H]], axis=-1)


def gaussian_fourier_projection_ref(x, W):
    """Pure-JAX reference mirroring the PyTorch module."""
    x_proj = x[:, None] * W[None, :] * 2.0 * np.pi
    return jnp.concatenate([jnp.sin(x_proj), jnp.cos(x_proj)], axis=-1)


if __name__ == "__main__":
    key = jax.random.PRNGKey(0)
    k_w, k_x, k_w2, k_x2 = jax.random.split(key, 4)

    # --- Primary check (module defaults): embed_dim=256 -> H=128 (aligned) ---
    embed_dim = 256
    scale = 30.0
    B = 8

    W = jax.random.normal(k_w, (embed_dim // 2,), dtype=jnp.float32) * scale
    x = jax.random.uniform(k_x, (B,), dtype=jnp.float32)

    out = gaussian_fourier_projection(x, W)
    out = jax.block_until_ready(out)
    ref = gaussian_fourier_projection_ref(x, W)
    # atol absorbs sin/cos range-reduction differences for |arg| up to ~500.
    np.testing.assert_allclose(np.asarray(out), np.asarray(ref),
                               rtol=1e-5, atol=1e-4)
    assert out.shape == (B, embed_dim)

    # --- Secondary check: batch padding (B % 8 != 0, multi-step grid) and the
    #     unaligned half-dim fallback path (H = 20 -> padded to 128). ---------
    embed_dim2 = 40
    B2 = 13
    W2 = jax.random.normal(k_w2, (embed_dim2 // 2,), dtype=jnp.float32)
    x2 = jax.random.uniform(k_x2, (B2,), dtype=jnp.float32)

    out2 = gaussian_fourier_projection(x2, W2)
    out2 = jax.block_until_ready(out2)
    ref2 = gaussian_fourier_projection_ref(x2, W2)
    np.testing.assert_allclose(np.asarray(out2), np.asarray(ref2),
                               rtol=1e-5, atol=1e-4)
    assert out2.shape == (B2, embed_dim2)

    print("KERNEL_OK")
</pallas_src>

<mosaic_0001>
module attributes {stable_mosaic.version = 11 : i64} {
  func.func @kernel(%arg0: i32, %arg1: memref<8x1xf32, #tpu.memory_space<vmem>>, %arg2: memref<1x128xf32, #tpu.memory_space<vmem>>, %arg3: memref<8x256xf32, #tpu.memory_space<vmem>>) attributes {dimension_semantics = [#tpu.dimension_semantics<parallel>], iteration_bounds = array<i64: 1>, scalar_prefetch = 0 : i64, scratch_operands = 0 : i64, tpu.core_type = #tpu.core_type<tc>, window_params = [{transform_indices = @transform_0, window_bounds = array<i64: 8, 1>}, {pipeline_mode = #tpu.pipeline_mode<synchronous>, transform_indices = @transform_1, window_bounds = array<i64: 1, 128>}, {transform_indices = @transform_2, window_bounds = array<i64: 8, 256>}]} {
    %c0 = arith.constant 0 : index
    %c0_0 = arith.constant 0 : index
    %0 = vector.load %arg1[%c0, %c0_0] : memref<8x1xf32, #tpu.memory_space<vmem>>, vector<8x1xf32>
    %c0_1 = arith.constant 0 : index
    %c0_2 = arith.constant 0 : index
    %1 = vector.load %arg2[%c0_1, %c0_2] : memref<1x128xf32, #tpu.memory_space<vmem>>, vector<1x128xf32>
    %2 = vector.broadcast %0 : vector<8x1xf32> to vector<8x128xf32>
    %3 = vector.broadcast %1 : vector<1x128xf32> to vector<8x128xf32>
    %4 = arith.mulf %2, %3 : vector<8x128xf32>
    %cst = arith.constant 2.000000e+00 : f32
    %5 = vector.broadcast %cst : f32 to vector<8x128xf32>
    %6 = arith.mulf %4, %5 : vector<8x128xf32>
    %cst_3 = arith.constant 3.14159274 : f32
    %7 = vector.broadcast %cst_3 : f32 to vector<8x128xf32>
    %8 = arith.mulf %6, %7 : vector<8x128xf32>
    %9 = math.sin %8 : vector<8x128xf32>
    %c0_4 = arith.constant 0 : index
    %c0_5 = arith.constant 0 : index
    %10 = vector.load %arg3[%c0_4, %c0_5] : memref<8x256xf32, #tpu.memory_space<vmem>>, vector<8x128xf32>
    tpu.vector_store %arg3[%c0_4, %c0_5], %9 {strides = array<i32>} : memref<8x256xf32, #tpu.memory_space<vmem>>, vector<8x128xf32>,
    %11 = math.cos %8 : vector<8x128xf32>
    %c0_6 = arith.constant 0 : index
    %c128 = arith.constant 128 : index
    %12 = vector.load %arg3[%c0_6, %c128] : memref<8x256xf32, #tpu.memory_space<vmem>>, vector<8x128xf32>
    tpu.vector_store %arg3[%c0_6, %c128], %11 {strides = array<i32>} : memref<8x256xf32, #tpu.memory_space<vmem>>, vector<8x128xf32>,
    return
  }
  func.func @transform_0(%arg0: i32) -> (i32, i32) {
    %c0_i32 = arith.constant 0 : i32
    %c0_i32_0 = arith.constant 0 : i32
    return %arg0, %c0_i32 : i32, i32
  }
  func.func @transform_1(%arg0: i32) -> (i32, i32) {
    %c0_i32 = arith.constant 0 : i32
    %c0_i32_0 = arith.constant 0 : i32
    %c0_i32_1 = arith.constant 0 : i32
    return %c0_i32, %c0_i32_0 : i32, i32
  }
  func.func @transform_2(%arg0: i32) -> (i32, i32) {
    %c0_i32 = arith.constant 0 : i32
    %c0_i32_0 = arith.constant 0 : i32
    return %arg0, %c0_i32 : i32, i32
  }
}

</mosaic_0001>

<llo_original>
// kernel: tpu_custom_call.1
$region0: #{tpu_custom_call.1}
  #allocation0 [shape = 'u32[]', space=smem, size = 0x4, offset = 0x4, fixed_abs, tag = 'smem constant byte address 0x4 - core index']
  #allocation1 [shape = 'u32[144,128]{1,0:T(1,128)}', space=vmem, size = 0x12000, scoped, tag = 'internal scratch']
  %s0 = inlined_call_operand.vmem [shape: f32[8,1], index: 0, kind: input, shape index: {}]
  %s1 = inlined_call_operand.vmem [shape: f32[1,128], index: 1, kind: input, shape index: {}]
  %s2 = inlined_call_operand.hbm [shape: f32[8,256], index: 2, kind: output, shape index: {}]
  %s3 = sld [smem:[#allocation0]]
  $region18: #{tpu_custom_call.1} parent=0
    _
  %s5 = ssub.s32 1, %s3
  %s6 = scalar_select 0, %s5, %s3
  $region1: #{tpu_custom_call.1} parent=0
    #allocation2 [shape = 'u8[8192]{0}', space=vmem, size = 0x2000, scoped, tag = 'output window, operand 0, single buffered']
    #allocation3 [shape = 's32[1]{0}', space=sflag, size = 0x4, scoped, tag = 'scoped memory for tpu_custom_call.1']
    %7 = vsyncpa [#allocation3], 0
    // Predicated region
    $region2: #{tpu_custom_call.1} parent=1 // pred_check
      _
    $region3: #{tpu_custom_call.1} parent=1 // pred_check_branch
      %9 = sbr.rel (0) target = $region5
    $region4: #{tpu_custom_call.1} parent=1 // pred_region
      _
    $region5: #{tpu_custom_call.1} parent=1 // pred_fallthru
      _
    // Predicated region
    $region6: #{tpu_custom_call.1} parent=1 // pred_check
      _
    $region7: #{tpu_custom_call.1} parent=1 // pred_check_branch
      %11 = sbr.rel (0) target = $region9
    $region8: #{tpu_custom_call.1} parent=1 // pred_region
      _
    $region9: #{tpu_custom_call.1} parent=1 // pred_fallthru
      _
    %v12 = vld [vmem:[%s0] sm:$0xff]
    %v13 = vld [vmem:[%s1] sm:$0x1]
    %15 = vset.pattern.permute.xlu0 0
    %16 = vperm.xlu0 %15, %v12
    %v17 = vpop.permute.xlu0 %16
    %v20 = vlaneseq
    %v21 = vshrl.u32 %v20, 7
    %v22 = vsub.s32 0, %v21
    %v23 = vrot.slane %v13, %v22
    %v25 = vmul.f32 %v17, %v23
    %v26 = vmul.f32 %v25, 2.0
    %v27 = vmul.f32 %v26, 3.1415927
    %v28 = vand.u32 2147483647, %v27
    %vm29 = vcmp.le.f32.partialorder %v28, 0.7853982
    %vm30 = vcmp.lt.s32.totalorder %v27, 0
    %v31 = vand.u32 %v27, 2139095040
    %v32 = vshrl.u32 %v31, 23
    %v33 = vsub.s32 %v32, 127
    %v34 = vand.u32 2147483647, %v27
    %v35 = vand.u32 %v34, 8388607
    %v36 = vor.u32 %v35, 8388608
    %v37 = vsub.s32 0, %v36
    %v38 = vadd.s32 %v33, 1
    %vm39 = vcmp.gt.s32.totalorder %v38, 0
    %v40 = vsel %vm39, %v38, 0
    %v41 = vshrl.u32 %v40, 5
    %v42 = vand.u32 %v40, 31
    %v43 = vsub.s32 32, %v42
    %v44 = vshrl.u32 683565275, %v43
    %v45 = vshll.u32 683565275, %v42
    %v46 = vshrl.u32 2475754826, %v43
    %v47 = vor.u32 %v45, %v46
    %v48 = vshll.u32 2475754826, %v42
    %v49 = vshrl.u32 2131351028, %v43
    %v50 = vor.u32 %v48, %v49
    %v51 = vshll.u32 2131351028, %v42
    %v52 = vshrl.u32 2102212464, %v43
    %v53 = vor.u32 %v51, %v52
    %v54 = vshll.u32 2102212464, %v42
    %v55 = vshrl.u32 920167782, %v43
    %v56 = vor.u32 %v54, %v55
    %v57 = vshll.u32 920167782, %v42
    %v58 = vshrl.u32 1326507024, %v43
    %v59 = vor.u32 %v57, %v58
    %vm60 = vcmp.lt.s32.totalorder %v41, 1
    %vm61 = vcmp.lt.s32.totalorder %v41, 2
    %vm62 = vcmp.lt.s32.totalorder %v41, 3
    %vm63 = vcmp.lt.s32.totalorder %v41, 4
    %v64 = vsel %vm60, %v44, %v47
    %v65 = vsel %vm63, %v53, 2102212464
    %v66 = vsel %vm62, %v50, %v65
    %v67 = vsel %vm61, %v64, %v66
    %v68 = vsel %vm60, %v47, %v50
    %v69 = vsel %vm63, %v56, 920167782
    %v70 = vsel %vm62, %v53, %v69
    %v71 = vsel %vm61, %v68, %v70
    %v72 = vsel %vm60, %v50, %v53
    %v73 = vsel %vm63, %v59, 1326507024
    %v74 = vsel %vm62, %v56, %v73
    %v75 = vsel %vm61, %v72, %v74
    %v76 = vshll.u32 %v36, 8
    %v77 = vmul.u32.u64.compose %v76, %v75
    %v78 = vextract.low.u32 %v77
    %v79 = vextract.high.u32 %v77
    %v80 = vmul.u32.u64.compose %v76, %v71
    %v81 = vextract.low.u32 %v80
    %v82 = vextract.high.u32 %v80
    %v83 = vmul.u32 %v76, %v67
    %v84 = vadd.s32 %v79, %v81
    %vm85 = vc.u32 %v79, %v81
    %v86 = vadd.s32 %v82, 1
    %v87 = vsel %vm85, %v86, %v82
    %v88 = vadd.s32 %v83, %v87
    %v89 = vadd.s32 %v88, 536870912
    %v90 = vshrl.u32 %v89, 30
    %v91 = vshll.u32 %v90, 30
    %v92 = vsub.s32 %v88, %v91
    %vm93 = vcmp.lt.s32.totalorder %v92, 0
    %v94 = vsub.s32 0, %v92
    %v95 = vsel %vm93, %v94, %v92
    %v96 = vclz %v95
    %v97 = vsub.s32 %v96, 2
    %vm98 = vcmp.gt.s32.totalorder 0, %v97
    %v99 = vsel %vm98, 0, %v97
    %v100 = vsub.s32 32, %v99
    %v101 = vshll.u32 %v92, %v99
    %v102 = vshrl.u32 %v84, %v100
    %v103 = vor.u32 %v101, %v102
    %v104 = vsub.s32 4294967266, %v99
    %v105 = vadd.s32 %v104, 127
    %v106 = vshll.u32 %v105, 23
    %v107 = vor.u32 4788187, %v106
    %v108 = vand.u32 2147483647, %v107
    %v110 = vcvt.s32.f32 %v103
    %v111 = vmul.f32 %v110, %v108
    %v112 = vxor.u32 %v111, 2147483648
    %v113 = vsel %vm30, %v112, %v111
    %v114 = vsub.s32 4, %v90
    %v115 = vsel %vm30, %v114, %v90
    %v116 = vsel %vm29, %v27, %v113
    %v117 = vsel %vm29, 0, %v115
    %v118 = vcosq.f32.pop %v116
    %v119 = vsinq.f32.pop %v116
    %vm120 = vweird.f32 %v27
    %v121 = vadd.s32 %v117, 3
    %v122 = vand.u32 %v121, 3
    %vm123 = vcmp.lt.s32.totalorder %v122, 2
    %vm124 = vcmp.eq.s32.totalorder %v122, 0
    %v125 = vxor.u32 %v119, 2147483648
    %v126 = vsel %vm124, %v118, %v125
    %vm127 = vcmp.eq.s32.totalorder %v122, 2
    %v128 = vxor.u32 %v118, 2147483648
    %v129 = vsel %vm127, %v128, %v119
    %v130 = vsel %vm123, %v126, %v129
    %v131 = vsel %vm120, nan, %v130
    %132 = vst [vmem:[#allocation2] sm:$0xff] %v131
    %v133 = vand.u32 2147483647, %v27
    %vm134 = vcmp.le.f32.partialorder %v133, 0.7853982
    %vm135 = vcmp.lt.s32.totalorder %v27, 0
    %v136 = vand.u32 %v27, 2139095040
    %v137 = vshrl.u32 %v136, 23
    %v138 = vsub.s32 %v137, 127
    %v139 = vand.u32 2147483647, %v27
    %v140 = vand.u32 %v139, 8388607
    %v141 = vor.u32 %v140, 8388608
    %v142 = vsub.s32 0, %v141
    %v143 = vadd.s32 %v138, 1
    %vm144 = vcmp.gt.s32.totalorder %v143, 0
    %v145 = vsel %vm144, %v143, 0
    %v146 = vshrl.u32 %v145, 5
    %v147 = vand.u32 %v145, 31
    %v148 = vsub.s32 32, %v147
    %v149 = vshrl.u32 683565275, %v148
    %v150 = vshll.u32 683565275, %v147
    %v151 = vshrl.u32 2475754826, %v148
    %v152 = vor.u32 %v150, %v151
    %v153 = vshll.u32 2475754826, %v147
    %v154 = vshrl.u32 2131351028, %v148
    %v155 = vor.u32 %v153, %v154
    %v156 = vshll.u32 2131351028, %v147
    %v157 = vshrl.u32 2102212464, %v148
    %v158 = vor.u32 %v156, %v157
    %v159 = vshll.u32 2102212464, %v147
    %v160 = vshrl.u32 920167782, %v148
    %v161 = vor.u32 %v159, %v160
    %v162 = vshll.u32 920167782, %v147
    %v163 = vshrl.u32 1326507024, %v148
    %v164 = vor.u32 %v162, %v163
    %vm165 = vcmp.lt.s32.totalorder %v146, 1
    %vm166 = vcmp.lt.s32.totalorder %v146, 2
    %vm167 = vcmp.lt.s32.totalorder %v146, 3
    %vm168 = vcmp.lt.s32.totalorder %v146, 4
    %v169 = vsel %vm165, %v149, %v152
    %v170 = vsel %vm168, %v158, 2102212464
    %v171 = vsel %vm167, %v155, %v170
    %v172 = vsel %vm166, %v169, %v171
    %v173 = vsel %vm165, %v152, %v155
    %v174 = vsel %vm168, %v161, 920167782
    %v175 = vsel %vm167, %v158, %v174
    %v176 = vsel %vm166, %v173, %v175
    %v177 = vsel %vm165, %v155, %v158
    %v178 = vsel %vm168, %v164, 1326507024
    %v179 = vsel %vm167, %v161, %v178
    %v180 = vsel %vm166, %v177, %v179
    %v181 = vshll.u32 %v141, 8
    %v182 = vmul.u32.u64.compose %v181, %v180
    %v183 = vextract.low.u32 %v182
    %v184 = vextract.high.u32 %v182
    %v185 = vmul.u32.u64.compose %v181, %v176
    %v186 = vextract.low.u32 %v185
    %v187 = vextract.high.u32 %v185
    %v188 = vmul.u32 %v181, %v172
    %v189 = vadd.s32 %v184, %v186
    %vm190 = vc.u32 %v184, %v186
    %v191 = vadd.s32 %v187, 1
    %v192 = vsel %vm190, %v191, %v187
    %v193 = vadd.s32 %v188, %v192
    %v194 = vadd.s32 %v193, 536870912
    %v195 = vshrl.u32 %v194, 30
    %v196 = vshll.u32 %v195, 30
    %v197 = vsub.s32 %v193, %v196
    %vm198 = vcmp.lt.s32.totalorder %v197, 0
    %v199 = vsub.s32 0, %v197
    %v200 = vsel %vm198, %v199, %v197
    %v201 = vclz %v200
    %v202 = vsub.s32 %v201, 2
    %vm203 = vcmp.gt.s32.totalorder 0, %v202
    %v204 = vsel %vm203, 0, %v202
    %v205 = vsub.s32 32, %v204
    %v206 = vshll.u32 %v197, %v204
    %v207 = vshrl.u32 %v189, %v205
    %v208 = vor.u32 %v206, %v207
    %v209 = vsub.s32 4294967266, %v204
    %v210 = vadd.s32 %v209, 127
    %v211 = vshll.u32 %v210, 23
    %v212 = vor.u32 4788187, %v211
    %v213 = vand.u32 2147483647, %v212
    %v215 = vcvt.s32.f32 %v208
    %v216 = vmul.f32 %v215, %v213
    %v217 = vxor.u32 %v216, 2147483648
    %v218 = vsel %vm135, %v217, %v216
    %v219 = vsub.s32 4, %v195
    %v220 = vsel %vm135, %v219, %v195
    %v221 = vsel %vm134, %v27, %v218
    %v222 = vsel %vm134, 0, %v220
    %v223 = vcosq.f32.pop %v221
    %v224 = vsinq.f32.pop %v221
    %vm225 = vweird.f32 %v27
    %v226 = vand.u32 %v222, 3
    %vm227 = vcmp.lt.s32.totalorder %v226, 2
    %vm228 = vcmp.eq.s32.totalorder %v226, 0
    %v229 = vxor.u32 %v224, 2147483648
    %v230 = vsel %vm228, %v223, %v229
    %vm231 = vcmp.eq.s32.totalorder %v226, 2
    %v232 = vxor.u32 %v223, 2147483648
    %v233 = vsel %vm231, %v232, %v224
    %v234 = vsel %vm227, %v230, %v233
    %v235 = vsel %vm225, nan, %v234
    %236 = vst [vmem:[#allocation2 + $0x8] sm:$0xff] %v235
    // Predicated region
    $region10: #{tpu_custom_call.1} parent=1 // pred_check
      _
    $region11: #{tpu_custom_call.1} parent=1 // pred_check_branch
      %238 = sbr.rel (0) target = $region13
    $region12: #{tpu_custom_call.1} parent=1 // pred_region
      %s240 = ssub.s32 256, 256
      %241 = vsyncadd [#allocation3], %s240
      %s243 = sshll.u32 [#allocation2], 4
      %s244 = int_to_ptr.vmem [resolvable:$true] %s243
      %246 = dma.vmem_to_hbm [thread:$0]  %s244, 256, %s2, [#allocation3]
    $region13: #{tpu_custom_call.1} parent=1 // pred_fallthru
      _
    // Predicated region
    $region14: #{tpu_custom_call.1} parent=1 // pred_check
      _
    $region15: #{tpu_custom_call.1} parent=1 // pred_check_branch
      %248 = sbr.rel (0) target = $region17
    $region16: #{tpu_custom_call.1} parent=1 // pred_region
      %249 = dma.done [#allocation3], 256
    $region17: #{tpu_custom_call.1} parent=1 // pred_fallthru
      _
    %250 = vsyncpa [#allocation3], 1

</llo_original>
